<compile_context>
chip_gen: v7x
topology: tpu7x:2x2x1
jax: 0.10.0
libtpu: 0.0.40
codegen_flags: <defaults>
</compile_context>

<pallas_src>
import functools

import jax
import jax.numpy as jnp
from jax.experimental import pallas as pl
from jax.experimental.pallas import tpu as pltpu


def _apply_act(y, act):
    """Elementwise activations supported by get_activation() (f32 epilogue)."""
    if act == "silu":
        return y * jax.nn.sigmoid(y)
    if act == "relu":
        return jnp.maximum(y, 0.0)
    if act == "lrelu":
        return jnp.where(y > 0.0, y, 0.1 * y)
    if act == "hardswish":
        return y * jnp.clip(y + 3.0, 0.0, 6.0) * (1.0 / 6.0)
    raise ValueError("Unsupported act type: {}".format(act))


def _conv_bn_act_kernel(x_ref, w_ref, shift_ref, o_ref, acc_ref, *,
                        ksize, stride, ow, act):
    """One grid step = one vertical tap (kh) of one output row of one image.

    x_ref:     (Wpad, Cin)            bf16  padded input row  stride*oh + kh
    w_ref:     (K, K, Cin, Cout_p)    bf16  BN-scale-folded weight (VMEM resident)
    shift_ref: (1, Cout_p)            f32   BN shift (beta - mean*scale)
    o_ref:     (OW, Cout_p)           f32   output row
    acc_ref:   (OW, Cout_p)           f32   accumulator scratch
    """
    kh = pl.program_id(2)

    @pl.when(kh == 0)
    def _init():
        acc_ref[...] = jnp.zeros_like(acc_ref)

    w_row = w_ref[kh]                        # (K, Cin, Cout_p): dynamic leading index
    acc = acc_ref[...]
    for kw in range(ksize):                  # horizontal taps reuse the resident row
        if stride == 1:
            patch = x_ref[pl.ds(kw, ow), :]               # (OW, Cin) contiguous
        else:
            patch = x_ref[pl.ds(kw, ow, stride), :]       # (OW, Cin) strided
        acc = acc + jnp.dot(patch, w_row[kw],             # (Cin, Cout_p)
                            preferred_element_type=jnp.float32)
    acc_ref[...] = acc

    @pl.when(kh == ksize - 1)
    def _finalize():
        y = acc_ref[...] + shift_ref[...]    # fused BN (eval) shift, f32
        o_ref[...] = _apply_act(y, act).astype(o_ref.dtype)


def _pointwise_bn_act_kernel(x_ref, w_ref, shift_ref, o_ref, *, act):
    """1x1 stride-1 BaseConv: pointwise matmul over a block of pixels.

    x_ref: (block_m, Cin) bf16, w_ref: (Cin, Cout_p) bf16 (resident),
    shift_ref: (1, Cout_p) f32, o_ref: (block_m, Cout_p) f32.
    """
    y = jnp.dot(x_ref[...], w_ref[...], preferred_element_type=jnp.float32)
    y = y + shift_ref[...]
    o_ref[...] = _apply_act(y, act).astype(o_ref.dtype)


def _round_up(v, m):
    return (v + m - 1) // m * m


def base_conv_forward(x_nhwc, weight_hwio, bn_gamma, bn_beta, bn_mean, bn_var,
                      *, stride=1, eps=1e-5, act="silu", conv_bias=None,
                      lane=128, block_m=512):
    """BaseConv.forward: act(bn(conv(x))), groups=1.

    x_nhwc:      [N, H, W, Cin]       float32
    weight_hwio: [K, K, Cin, Cout]    float32
    returns:     [N, OH, OW, Cout]    float32
    """
    n, h, w, cin = x_nhwc.shape
    ksize = weight_hwio.shape[0]
    assert weight_hwio.shape[2] == cin, "groups != 1 is not supported"
    cout = weight_hwio.shape[3]
    pad = (ksize - 1) // 2

    oh = (h + 2 * pad - ksize) // stride + 1
    ow = (w + 2 * pad - ksize) // stride + 1
    wpad = w + 2 * pad

    # Lane-dense output channels (unmasked stores / full MXU result columns).
    cout_p = _round_up(cout, lane)

    # Fold BatchNorm (eval) scale into the weight; keep only the shift.
    scale = bn_gamma * jax.lax.rsqrt(bn_var + eps)                 # [Cout]
    shift = bn_beta - bn_mean * scale                              # [Cout]
    if conv_bias is not None:
        shift = shift + conv_bias * scale

    w_folded = weight_hwio * scale[None, None, None, :]
    w_folded = jnp.pad(w_folded, ((0, 0), (0, 0), (0, 0), (0, cout_p - cout)))
    w_b = w_folded.astype(jnp.bfloat16)                            # [K, K, Cin, Cout_p]
    shift_p = (jnp.pad(shift, (0, cout_p - cout))
               .reshape(1, cout_p).astype(jnp.float32))

    vmem_limit = 48 * 1024 * 1024                                  # < 64 MiB (v7x-safe)

    # ---------------- 1x1 / stride-1 fast path: pointwise matmul ------------
    if ksize == 1 and stride == 1:
        m = n * h * w
        bm = block_m if m >= block_m else _round_up(m, 8)
        m_p = _round_up(m, bm)
        x2 = x_nhwc.reshape(m, cin).astype(jnp.bfloat16)
        x2 = jnp.pad(x2, ((0, m_p - m), (0, 0)))
        w2 = w_b.reshape(cin, cout_p)

        out = pl.pallas_call(
            functools.partial(_pointwise_bn_act_kernel, act=act),
            out_shape=jax.ShapeDtypeStruct((m_p, cout_p), jnp.float32),
            grid_spec=pltpu.PrefetchScalarGridSpec(
                num_scalar_prefetch=0,
                grid=(m_p // bm,),
                in_specs=[
                    pl.BlockSpec((bm, cin), lambda i: (i, 0)),
                    pl.BlockSpec((cin, cout_p), lambda i: (0, 0)),   # resident
                    pl.BlockSpec((1, cout_p), lambda i: (0, 0)),
                ],
                out_specs=pl.BlockSpec((bm, cout_p), lambda i: (i, 0)),
            ),
            compiler_params=pltpu.CompilerParams(
                dimension_semantics=("parallel",),
                vmem_limit_bytes=vmem_limit,
            ),
        )(x2, w2, shift_p)
        return out[:m, :cout].reshape(n, h, w, cout)

    # ---------------- General KxK path: shifted-row accumulation ------------
    # Only the conv's own spatial halo pad; bf16 halves the HBM read bytes.
    x_p = jnp.pad(x_nhwc, ((0, 0), (pad, pad), (pad, pad), (0, 0))).astype(jnp.bfloat16)

    kernel = functools.partial(_conv_bn_act_kernel, ksize=ksize, stride=stride,
                               ow=ow, act=act)

    out = pl.pallas_call(
        kernel,
        out_shape=jax.ShapeDtypeStruct((n, oh, ow, cout_p), jnp.float32),
        grid_spec=pltpu.PrefetchScalarGridSpec(
            num_scalar_prefetch=0,
            grid=(n, oh, ksize),
            in_specs=[
                # Padded input row stride*r + kh; N and H dims squeezed so the
                # kernel sees a clean 2D (Wpad, Cin) tile (no in-kernel reshapes).
                pl.BlockSpec((None, None, wpad, cin),
                             lambda b, r, kh: (b, stride * r + kh, 0, 0)),
                # Whole folded weight, constant block index -> single DMA,
                # resident in VMEM for the entire grid.
                pl.BlockSpec((ksize, ksize, cin, cout_p),
                             lambda b, r, kh: (0, 0, 0, 0)),
                pl.BlockSpec((1, cout_p), lambda b, r, kh: (0, 0)),
            ],
            out_specs=pl.BlockSpec((None, None, ow, cout_p),
                                   lambda b, r, kh: (b, r, 0, 0)),
            scratch_shapes=[pltpu.VMEM((ow, cout_p), jnp.float32)],
        ),
        compiler_params=pltpu.CompilerParams(
            # Batch / output-row axes are independent (megacore-shardable on
            # v7x); the vertical-tap axis is a reduction.
            dimension_semantics=("parallel", "parallel", "arbitrary"),
            vmem_limit_bytes=vmem_limit,
        ),
    )(x_p, w_b, shift_p)

    return out[..., :cout]


# ----------------------------- references -----------------------------------
def _reference_bf16(x_nhwc, weight_hwio, bn_gamma, bn_beta, bn_mean, bn_var,
                    *, stride=1, eps=1e-5):
    """Same math as the kernel (bf16 operands, f32 accumulation / epilogue)."""
    ksize = weight_hwio.shape[0]
    pad = (ksize - 1) // 2
    scale = bn_gamma * jax.lax.rsqrt(bn_var + eps)
    shift = bn_beta - bn_mean * scale
    w_folded = (weight_hwio * scale[None, None, None, :]).astype(jnp.bfloat16)
    y = jax.lax.conv_general_dilated(
        x_nhwc.astype(jnp.bfloat16), w_folded,
        window_strides=(stride, stride),
        padding=[(pad, pad), (pad, pad)],
        dimension_numbers=("NHWC", "HWIO", "NHWC"),
        preferred_element_type=jnp.float32,
    )
    y = y + shift
    return y * jax.nn.sigmoid(y)


def _reference_f32(x_nhwc, weight_hwio, bn_gamma, bn_beta, bn_mean, bn_var,
                   *, stride=1, eps=1e-5):
    """Exact module semantics (f32 conv -> BN(eval) -> SiLU)."""
    ksize = weight_hwio.shape[0]
    pad = (ksize - 1) // 2
    y = jax.lax.conv_general_dilated(
        x_nhwc, weight_hwio,
        window_strides=(stride, stride),
        padding=[(pad, pad), (pad, pad)],
        dimension_numbers=("NHWC", "HWIO", "NHWC"),
    )
    scale = bn_gamma * jax.lax.rsqrt(bn_var + eps)
    shift = bn_beta - bn_mean * scale
    y = y * scale + shift
    return y * jax.nn.sigmoid(y)


if __name__ == "__main__":
    # Shapes consistent with BaseConv(in_channels=4, out_channels=8, ksize=3, stride=1).
    N, Cin, H, W = 2, 4, 16, 16
    Cout, K, stride = 8, 3, 1

    key = jax.random.PRNGKey(0)
    kx, kwt, kg, kb, km, kv = jax.random.split(key, 6)

    x_nhwc = jax.random.normal(kx, (N, H, W, Cin), dtype=jnp.float32)
    weight_hwio = jax.random.normal(kwt, (K, K, Cin, Cout), dtype=jnp.float32) * 0.1
    bn_gamma = 1.0 + 0.1 * jax.random.normal(kg, (Cout,), dtype=jnp.float32)
    bn_beta = 0.1 * jax.random.normal(kb, (Cout,), dtype=jnp.float32)
    bn_mean = 0.1 * jax.random.normal(km, (Cout,), dtype=jnp.float32)
    bn_var = jnp.abs(jax.random.normal(kv, (Cout,), dtype=jnp.float32)) + 0.5

    args = (x_nhwc, weight_hwio, bn_gamma, bn_beta, bn_mean, bn_var)

    # 3x3 / stride-1 BaseConv (general path).
    out = jax.block_until_ready(base_conv_forward(*args, stride=stride))
    assert out.shape == (N, H, W, Cout)

    ref_b = _reference_bf16(*args, stride=stride)
    assert jnp.allclose(out, ref_b, rtol=2e-3, atol=2e-3), "mismatch vs bf16 reference"

    ref_f = _reference_f32(*args, stride=stride)
    assert jnp.allclose(out, ref_f, rtol=1.5e-1, atol=7.5e-2), "mismatch vs f32 reference"

    # 1x1 BaseConv (pointwise fast path).
    w1 = jax.random.normal(kwt, (1, 1, Cin, Cout), dtype=jnp.float32) * 0.1
    out1 = jax.block_until_ready(
        base_conv_forward(x_nhwc, w1, bn_gamma, bn_beta, bn_mean, bn_var, stride=1))
    ref1 = _reference_bf16(x_nhwc, w1, bn_gamma, bn_beta, bn_mean, bn_var, stride=1)
    assert out1.shape == (N, H, W, Cout)
    assert jnp.allclose(out1, ref1, rtol=2e-3, atol=2e-3), "mismatch (1x1) vs bf16 reference"

    print("KERNEL_OK")
</pallas_src>

<mosaic_0001>
module attributes {stable_mosaic.version = 11 : i64} {
  func.func @_conv_bn_act_kernel(%arg0: i32, %arg1: i32, %arg2: i32, %arg3: memref<1x1x18x4xbf16, #tpu.memory_space<vmem>>, %arg4: memref<3x3x4x128xbf16, #tpu.memory_space<vmem>>, %arg5: memref<1x128xf32, #tpu.memory_space<vmem>>, %arg6: memref<1x1x16x128xf32, #tpu.memory_space<vmem>>, %arg7: memref<16x128xf32, #tpu.memory_space<vmem>>) attributes {dimension_semantics = [#tpu.dimension_semantics<parallel>, #tpu.dimension_semantics<parallel>, #tpu.dimension_semantics<arbitrary>], iteration_bounds = array<i64: 2, 16, 3>, scalar_prefetch = 0 : i64, scratch_operands = 1 : i64, tpu.core_type = #tpu.core_type<tc>, window_params = [{transform_indices = @transform_0, window_bounds = array<i64: 1, 1, 18, 4>}, {pipeline_mode = #tpu.pipeline_mode<synchronous>, transform_indices = @transform_1, window_bounds = array<i64: 3, 3, 4, 128>}, {pipeline_mode = #tpu.pipeline_mode<synchronous>, transform_indices = @transform_2, window_bounds = array<i64: 1, 128>}, {transform_indices = @transform_3, window_bounds = array<i64: 1, 1, 16, 128>}]} {
    %c0_i32 = arith.constant 0 : i32
    %0 = arith.cmpi eq, %arg2, %c0_i32 : i32
    %1 = arith.extui %0 : i1 to i32
    %c0_i32_0 = arith.constant 0 : i32
    %2 = arith.cmpi ne, %1, %c0_i32_0 : i32
    scf.if %2 {
      %cst_20 = arith.constant 0.000000e+00 : f32
      %29 = vector.broadcast %cst_20 : f32 to vector<16x128xf32>
      %c0_21 = arith.constant 0 : index
      %c0_22 = arith.constant 0 : index
      %30 = vector.load %arg7[%c0_21, %c0_22] : memref<16x128xf32, #tpu.memory_space<vmem>>, vector<16x128xf32>
      tpu.vector_store %arg7[%c0_21, %c0_22], %29 {strides = array<i32>} : memref<16x128xf32, #tpu.memory_space<vmem>>, vector<16x128xf32>,
    } else {
    }
    %3 = arith.index_cast %arg2 : i32 to index
    %c0 = arith.constant 0 : index
    %c0_1 = arith.constant 0 : index
    %c0_2 = arith.constant 0 : index
    %4 = vector.load %arg4[%3, %c0, %c0_1, %c0_2] : memref<3x3x4x128xbf16, #tpu.memory_space<vmem>>, vector<1x3x4x128xbf16>
    %5 = vector.shape_cast %4 : vector<1x3x4x128xbf16> to vector<3x4x128xbf16>
    %c0_3 = arith.constant 0 : index
    %c0_4 = arith.constant 0 : index
    %6 = vector.load %arg7[%c0_3, %c0_4] : memref<16x128xf32, #tpu.memory_space<vmem>>, vector<16x128xf32>
    %c0_5 = arith.constant 0 : index
    %c0_6 = arith.constant 0 : index
    %c0_7 = arith.constant 0 : index
    %c0_8 = arith.constant 0 : index
    %7 = vector.load %arg3[%c0_5, %c0_6, %c0_7, %c0_8] : memref<1x1x18x4xbf16, #tpu.memory_space<vmem>>, vector<1x1x16x4xbf16>
    %8 = vector.shape_cast %7 : vector<1x1x16x4xbf16> to vector<16x4xbf16>
    %9 = vector.extract_strided_slice %5 {offsets = [0, 0, 0], sizes = [1, 4, 128], strides = [1, 1, 1]} : vector<3x4x128xbf16> to vector<1x4x128xbf16>
    %10 = vector.shape_cast %9 : vector<1x4x128xbf16> to vector<4x128xbf16>
    %cst = arith.constant dense<0.000000e+00> : vector<16x128xf32>
    %11 = tpu.matmul %8, %10, %cst {dimension_numbers = #tpu.dot_dimension_numbers<[1], [0], [0], [1], [0, 0, 1, 1], [], []>} : vector<16x4xbf16>, vector<4x128xbf16>, vector<16x128xf32> -> vector<16x128xf32>
    %12 = arith.addf %6, %11 : vector<16x128xf32>
    %c0_9 = arith.constant 0 : index
    %c0_10 = arith.constant 0 : index
    %c1 = arith.constant 1 : index
    %c0_11 = arith.constant 0 : index
    %13 = vector.load %arg3[%c0_9, %c0_10, %c1, %c0_11] : memref<1x1x18x4xbf16, #tpu.memory_space<vmem>>, vector<1x1x16x4xbf16>
    %14 = vector.shape_cast %13 : vector<1x1x16x4xbf16> to vector<16x4xbf16>
    %15 = vector.extract_strided_slice %5 {offsets = [1, 0, 0], sizes = [1, 4, 128], strides = [1, 1, 1]} : vector<3x4x128xbf16> to vector<1x4x128xbf16>
    %16 = vector.shape_cast %15 : vector<1x4x128xbf16> to vector<4x128xbf16>
    %cst_12 = arith.constant dense<0.000000e+00> : vector<16x128xf32>
    %17 = tpu.matmul %14, %16, %cst_12 {dimension_numbers = #tpu.dot_dimension_numbers<[1], [0], [0], [1], [0, 0, 1, 1], [], []>} : vector<16x4xbf16>, vector<4x128xbf16>, vector<16x128xf32> -> vector<16x128xf32>
    %18 = arith.addf %12, %17 : vector<16x128xf32>
    %c0_13 = arith.constant 0 : index
    %c0_14 = arith.constant 0 : index
    %c2 = arith.constant 2 : index
    %c0_15 = arith.constant 0 : index
    %19 = vector.load %arg3[%c0_13, %c0_14, %c2, %c0_15] : memref<1x1x18x4xbf16, #tpu.memory_space<vmem>>, vector<1x1x16x4xbf16>
    %20 = vector.shape_cast %19 : vector<1x1x16x4xbf16> to vector<16x4xbf16>
    %21 = vector.extract_strided_slice %5 {offsets = [2, 0, 0], sizes = [1, 4, 128], strides = [1, 1, 1]} : vector<3x4x128xbf16> to vector<1x4x128xbf16>
    %22 = vector.shape_cast %21 : vector<1x4x128xbf16> to vector<4x128xbf16>
    %cst_16 = arith.constant dense<0.000000e+00> : vector<16x128xf32>
    %23 = tpu.matmul %20, %22, %cst_16 {dimension_numbers = #tpu.dot_dimension_numbers<[1], [0], [0], [1], [0, 0, 1, 1], [], []>} : vector<16x4xbf16>, vector<4x128xbf16>, vector<16x128xf32> -> vector<16x128xf32>
    %24 = arith.addf %18, %23 : vector<16x128xf32>
    %c0_17 = arith.constant 0 : index
    %c0_18 = arith.constant 0 : index
    %25 = vector.load %arg7[%c0_17, %c0_18] : memref<16x128xf32, #tpu.memory_space<vmem>>, vector<16x128xf32>
    tpu.vector_store %arg7[%c0_17, %c0_18], %24 {strides = array<i32>} : memref<16x128xf32, #tpu.memory_space<vmem>>, vector<16x128xf32>,
    %c2_i32 = arith.constant 2 : i32
    %26 = arith.cmpi eq, %arg2, %c2_i32 : i32
    %27 = arith.extui %26 : i1 to i32
    %c0_i32_19 = arith.constant 0 : i32
    %28 = arith.cmpi ne, %27, %c0_i32_19 : i32
    scf.if %28 {
      %c0_20 = arith.constant 0 : index
      %c0_21 = arith.constant 0 : index
      %29 = vector.load %arg7[%c0_20, %c0_21] : memref<16x128xf32, #tpu.memory_space<vmem>>, vector<16x128xf32>
      %c0_22 = arith.constant 0 : index
      %c0_23 = arith.constant 0 : index
      %30 = vector.load %arg5[%c0_22, %c0_23] : memref<1x128xf32, #tpu.memory_space<vmem>>, vector<1x128xf32>
      %31 = vector.broadcast %30 : vector<1x128xf32> to vector<16x128xf32>
      %32 = arith.addf %29, %31 : vector<16x128xf32>
      %33 = arith.negf %32 : vector<16x128xf32>
      %34 = math.exp %33 : vector<16x128xf32>
      %cst_24 = arith.constant 1.000000e+00 : f32
      %35 = vector.broadcast %cst_24 : f32 to vector<16x128xf32>
      %36 = arith.addf %35, %34 : vector<16x128xf32>
      %37 = arith.divf %35, %36 : vector<16x128xf32>
      %38 = arith.mulf %32, %37 : vector<16x128xf32>
      %c0_25 = arith.constant 0 : index
      %c0_26 = arith.constant 0 : index
      %c0_27 = arith.constant 0 : index
      %c0_28 = arith.constant 0 : index
      %39 = vector.load %arg6[%c0_25, %c0_26, %c0_27, %c0_28] : memref<1x1x16x128xf32, #tpu.memory_space<vmem>>, vector<1x1x16x128xf32>
      %40 = vector.shape_cast %39 : vector<1x1x16x128xf32> to vector<16x128xf32>
      %41 = vector.shape_cast %38 : vector<16x128xf32> to vector<1x1x16x128xf32>
      tpu.vector_store %arg6[%c0_25, %c0_26, %c0_27, %c0_28], %41 {strides = array<i32>} : memref<1x1x16x128xf32, #tpu.memory_space<vmem>>, vector<1x1x16x128xf32>,
    } else {
    }
    return
  }
  func.func @transform_0(%arg0: i32, %arg1: i32, %arg2: i32) -> (i32, i32, i32, i32) {
    %c1_i32 = arith.constant 1 : i32
    %0 = arith.muli %c1_i32, %arg1 : i32
    %1 = arith.addi %0, %arg2 : i32
    %c0_i32 = arith.constant 0 : i32
    %c0_i32_0 = arith.constant 0 : i32
    %c0_i32_1 = arith.constant 0 : i32
    return %arg0, %1, %c0_i32, %c0_i32_0 : i32, i32, i32, i32
  }
  func.func @transform_1(%arg0: i32, %arg1: i32, %arg2: i32) -> (i32, i32, i32, i32) {
    %c0_i32 = arith.constant 0 : i32
    %c0_i32_0 = arith.constant 0 : i32
    %c0_i32_1 = arith.constant 0 : i32
    %c0_i32_2 = arith.constant 0 : i32
    %c0_i32_3 = arith.constant 0 : i32
    return %c0_i32, %c0_i32_0, %c0_i32_1, %c0_i32_2 : i32, i32, i32, i32
  }
  func.func @transform_2(%arg0: i32, %arg1: i32, %arg2: i32) -> (i32, i32) {
    %c0_i32 = arith.constant 0 : i32
    %c0_i32_0 = arith.constant 0 : i32
    %c0_i32_1 = arith.constant 0 : i32
    return %c0_i32, %c0_i32_0 : i32, i32
  }
  func.func @transform_3(%arg0: i32, %arg1: i32, %arg2: i32) -> (i32, i32, i32, i32) {
    %c0_i32 = arith.constant 0 : i32
    %c0_i32_0 = arith.constant 0 : i32
    %c0_i32_1 = arith.constant 0 : i32
    return %arg0, %arg1, %c0_i32, %c0_i32_0 : i32, i32, i32, i32
  }
}

</mosaic_0001>

<llo_original>
// kernel: tpu_custom_call.1
$region0: #{tpu_custom_call.1}
  #allocation0 [shape = 'u32[]', space=smem, size = 0x4, offset = 0x4, fixed_abs, tag = 'smem constant byte address 0x4 - core index']
  #allocation1 [shape = 'u32[144,128]{1,0:T(1,128)}', space=vmem, size = 0x12000, scoped, tag = 'internal scratch']
  #allocation2 [shape = 'f32[16,128]{1,0:T(8,128)}', space=vmem, size = 0x2000, scoped, tag = 'scratch operand']
  %s0 = inlined_call_operand.vmem [shape: bf16[2,18,18,4], index: 0, kind: input, shape index: {}]
  %s1 = inlined_call_operand.vmem [shape: bf16[3,3,4,128], index: 1, kind: input, shape index: {}]
  %s2 = inlined_call_operand.vmem [shape: f32[1,128], index: 2, kind: input, shape index: {}]
  %s3 = inlined_call_operand.hbm [shape: f32[2,16,16,128], index: 3, kind: output, shape index: {}]
  %s4 = sld [smem:[#allocation0]]
  $region53: #{tpu_custom_call.1} parent=0
    _
  %s6 = ssub.s32 1, %s4
  %s7 = scalar_select 0, %s6, %s4
  $region1: #{tpu_custom_call.1} parent=0
    #allocation3 [shape = 'u8[16384]{0}', space=vmem, size = 0x4000, scoped, tag = 'output window, operand 0']
    #allocation4 [shape = 's32[2]{0}', space=sflag, size = 0x8, scoped, tag = 'scoped memory for tpu_custom_call.1']
    %8 = vsyncpa [#allocation4], 0
    %s9 = scalar_lea.sflag [#allocation4], 1
    %10 = vsyncpa %s9, 0
    loop: start=0, step=1, limit=98
    $region2: #{tpu_custom_call.1} parent=1 // loop_pre_header
      _
    $region3: #{tpu_custom_call.1} parent=1 // loop_header
      %s12 = sphi 0, %s16
      %p13 = scmp.ge.s32.totalorder %s12, 98
      %s19 = sphi 0, %s38
      %s20 = sphi 0, %s34
      %s21 = sphi 0, %s30
      %s22 = sphi 0, %s19
      %s23 = sphi 0, %s20
      %s24 = sphi 0, %s21
      %s25 = sphi 0, %s22
      %s26 = sphi 0, %s23
      %s27 = sphi 0, %s24
      %s45 = sphi 0, %s47
      %s48 = sphi 0, %s45
      %s49 = sphi 0, %s48
      %s65 = sphi 0, %s49
      %s69 = sphi 0, %s69
      %s71 = sphi 0, %s69
      %s72 = sphi 0, %s71
      %s86 = sphi 0, %s72
      %s90 = sphi 0, %s90
      %s92 = sphi 0, %s90
      %s93 = sphi 0, %s92
      %s107 = sphi 0, %s93
      %s115 = sphi 0, %s117
      %s118 = sphi 0, %s115
      %s119 = sphi 0, %s118
      %s135 = sphi 0, %s119
    $region4: #{tpu_custom_call.1} parent=1 // loop_header_branch
      %15 = sbr.rel (%p13) target = $region8
    $region5: #{tpu_custom_call.1} parent=1 // loop_body
      %s17 = ssub.s32 %s12, 1
      %s18 = ssub.s32 %s12, 2
      %s28 = sadd.s32 1, %s21
      %p29 = scmp.ge.s32.totalorder %s28, 3
      %s30 = scalar_select %p29, 0, %s28
      %s31 = sadd.s32 1, %s20
      %s32 = scalar_select %p29, %s31, %s20
      %p33 = scmp.ge.s32.totalorder %s32, 16
      %s34 = scalar_select %p33, 0, %s32
      %s35 = sadd.s32 1, %s19
      %s36 = scalar_select %p33, %s35, %s19
      %p37 = scmp.ge.s32.totalorder %s36, 2
      %s38 = scalar_select %p37, 0, %s36
      %s39 = sadd.s32 %s20, %s21
      %s40 = sadd.s32 %s34, %s30
      %s41 = ssub.s32 %s19, %s38
      %s42 = ssub.s32 %s39, %s40
      %s43 = sor.u32 %s41, %s42
      %p44 = scmp.eq.s32.totalorder %s43, 0
      %s46 = sadd.s32 %s45, 1
      %s47 = scalar_select %p44, %s45, %s46
      %p50 = pneg %p44
      %p51 = scmp.eq.s32.totalorder %s12, 95
      %p52 = por %p50, %p51
      %p53 = scmp.ne.s32.totalorder %s45, %s48
      %p54 = scmp.eq.s32.totalorder %s12, 0
      %p55 = por %p53, %p54
      %p56 = scmp.ne.s32.totalorder %s45, %s48
      %p57 = scmp.eq.s32.totalorder %s17, 95
      %p58 = por %p56, %p57
      %p59 = scmp.ne.s32.totalorder %s48, %s49
      %p60 = scmp.eq.s32.totalorder %s17, 0
      %p61 = por %p59, %p60
      %p62 = scmp.ne.s32.totalorder %s48, %s49
      %p63 = scmp.eq.s32.totalorder %s18, 95
      %p64 = por %p62, %p63
      %p66 = scmp.ne.s32.totalorder %s49, %s65
      %p67 = scmp.eq.s32.totalorder %s18, 0
      %p68 = por %p66, %p67
      %s70 = sadd.s32 %s69, 1
      %p73 = scmp.eq.s32.totalorder %s12, 95
      %p74 = scmp.ne.s32.totalorder %s69, %s71
      %p75 = scmp.eq.s32.totalorder %s12, 0
      %p76 = por %p74, %p75
      %p77 = scmp.ne.s32.totalorder %s69, %s71
      %p78 = scmp.eq.s32.totalorder %s17, 95
      %p79 = por %p77, %p78
      %p80 = scmp.ne.s32.totalorder %s71, %s72
      %p81 = scmp.eq.s32.totalorder %s17, 0
      %p82 = por %p80, %p81
      %p83 = scmp.ne.s32.totalorder %s71, %s72
      %p84 = scmp.eq.s32.totalorder %s18, 95
      %p85 = por %p83, %p84
      %p87 = scmp.ne.s32.totalorder %s72, %s86
      %p88 = scmp.eq.s32.totalorder %s18, 0
      %p89 = por %p87, %p88
      %s91 = sadd.s32 %s90, 1
      %p94 = scmp.eq.s32.totalorder %s12, 95
      %p95 = scmp.ne.s32.totalorder %s90, %s92
      %p96 = scmp.eq.s32.totalorder %s12, 0
      %p97 = por %p95, %p96
      %p98 = scmp.ne.s32.totalorder %s90, %s92
      %p99 = scmp.eq.s32.totalorder %s17, 95
      %p100 = por %p98, %p99
      %p101 = scmp.ne.s32.totalorder %s92, %s93
      %p102 = scmp.eq.s32.totalorder %s17, 0
      %p103 = por %p101, %p102
      %p104 = scmp.ne.s32.totalorder %s92, %s93
      %p105 = scmp.eq.s32.totalorder %s18, 95
      %p106 = por %p104, %p105
      %p108 = scmp.ne.s32.totalorder %s93, %s107
      %p109 = scmp.eq.s32.totalorder %s18, 0
      %p110 = por %p108, %p109
      %s111 = ssub.s32 %s19, %s38
      %s112 = ssub.s32 %s20, %s34
      %s113 = sor.u32 %s111, %s112
      %p114 = scmp.eq.s32.totalorder %s113, 0
      %s116 = sadd.s32 %s115, 1
      %s117 = scalar_select %p114, %s115, %s116
      %p120 = pneg %p114
      %p121 = scmp.eq.s32.totalorder %s12, 95
      %p122 = por %p120, %p121
      %p123 = scmp.ne.s32.totalorder %s115, %s118
      %p124 = scmp.eq.s32.totalorder %s12, 0
      %p125 = por %p123, %p124
      %p126 = scmp.ne.s32.totalorder %s115, %s118
      %p127 = scmp.eq.s32.totalorder %s17, 95
      %p128 = por %p126, %p127
      %p129 = scmp.ne.s32.totalorder %s118, %s119
      %p130 = scmp.eq.s32.totalorder %s17, 0
      %p131 = por %p129, %p130
      %p132 = scmp.ne.s32.totalorder %s118, %s119
      %p133 = scmp.eq.s32.totalorder %s18, 95
      %p134 = por %p132, %p133
      %p136 = scmp.ne.s32.totalorder %s119, %s135
      %p137 = scmp.eq.s32.totalorder %s18, 0
      %p138 = por %p136, %p137
      %p139 = scmp.le.s32.totalorder 1, %s12
      %p140 = scmp.lt.s32.totalorder %s12, 97
      %p141 = pnand %p139, %p140
      %p142 = pneg %p141
      // Predicated region
      $region9: #{tpu_custom_call.1} parent=5 // pred_check
        _
      $region10: #{tpu_custom_call.1} parent=5 // pred_check_branch
        %144 = sbr.rel (%p141) target = $region12
      $region11: #{tpu_custom_call.1} parent=5 // pred_region
        %s145 = ssub.s32 %s12, 1
        // Predicated region
        $region13: #{tpu_custom_call.1} parent=11 // pred_check
          %p146 = pneg %p82
        $region14: #{tpu_custom_call.1} parent=11 // pred_check_branch
          %148 = sbr.rel (%p146) target = $region16
        $region15: #{tpu_custom_call.1} parent=11 // pred_region
          _
        $region16: #{tpu_custom_call.1} parent=11 // pred_fallthru
          _
        // Predicated region
        $region17: #{tpu_custom_call.1} parent=11 // pred_check
          %p149 = pneg %p103
        $region18: #{tpu_custom_call.1} parent=11 // pred_check_branch
          %151 = sbr.rel (%p149) target = $region20
        $region19: #{tpu_custom_call.1} parent=11 // pred_region
          _
        $region20: #{tpu_custom_call.1} parent=11 // pred_fallthru
          _
      $region12: #{tpu_custom_call.1} parent=5 // pred_fallthru
        _
      %p152 = scmp.lt.s32.totalorder %s12, 96
      // Predicated region
      $region21: #{tpu_custom_call.1} parent=5 // pred_check
        %p153 = pneg %p152
      $region22: #{tpu_custom_call.1} parent=5 // pred_check_branch
        %155 = sbr.rel (%p153) target = $region24
      $region23: #{tpu_custom_call.1} parent=5 // pred_region
        // Predicated region
        $region25: #{tpu_custom_call.1} parent=23 // pred_check
          %p156 = pneg %p55
        $region26: #{tpu_custom_call.1} parent=23 // pred_check_branch
          %158 = sbr.rel (%p156) target = $region28
        $region27: #{tpu_custom_call.1} parent=23 // pred_region
          %s159 = sadd.s32 %s20, %s21
          %p160 = scmp.lt.s32.totalorder %s19, 1
          %s161 = scalar_select %p160, %s19, 1
          %p162 = scmp.lt.s32.totalorder %s159, 17
          %s163 = scalar_select %p162, %s159, 17
          %s164 = smul.addr %s163, 3
          %s165 = smul.addr %s161, 54
          %s166 = sadd.s32 %s164, %s165
          %s167 = smul.addr %s166, 4
          %s168 = scalar_lea.vmem %s0, %s167
          %s169 = sadd.s32 %s20, %s21
        $region28: #{tpu_custom_call.1} parent=23 // pred_fallthru
          _
      $region24: #{tpu_custom_call.1} parent=5 // pred_fallthru
        _
      %p170 = scmp.le.s32.totalorder 1, %s12
      %p171 = scmp.lt.s32.totalorder %s12, 97
      %p172 = pnand %p170, %p171
      %p173 = pneg %p172
      // Predicated region
      $region29: #{tpu_custom_call.1} parent=5 // pred_check
        _
      $region30: #{tpu_custom_call.1} parent=5 // pred_check_branch
        %175 = sbr.rel (%p172) target = $region32
      $region31: #{tpu_custom_call.1} parent=5 // pred_region
        %s176 = ssub.s32 %s12, 1
        %s177 = sadd.s32 %s23, %s24
        %p178 = scmp.lt.s32.totalorder %s22, 1
        %s179 = scalar_select %p178, %s22, 1
        %p180 = scmp.lt.s32.totalorder %s177, 17
        %s181 = scalar_select %p180, %s177, 17
        %s182 = smul.addr %s181, 3
        %s183 = smul.addr %s179, 54
        %s184 = sadd.s32 %s182, %s183
        %s185 = smul.addr %s184, 4
        %s186 = scalar_lea.vmem %s0, %s185
        %p187 = pneg %p61
        %p188 = pneg %p58
        %p189 = pneg %p82
        %p190 = pneg %p79
        %p191 = pneg %p103
        %p192 = pneg %p100
        %p193 = pneg %p131
        %p194 = pneg %p128
        %s195 = sand.u32 %s118, 1
        %s196 = scalar_lea.sflag [#allocation4], %s195
        %s197 = sand.u32 %s118, 1
        %s198 = smul.addr %s197, 16
        %s199 = scalar_lea.vmem [#allocation3], %s198
        %s200 = sadd.s32 %s23, %s24
        %p201 = scmp.lt.s32.totalorder %s22, 1
        %s202 = scalar_select %p201, %s22, 1
        %p203 = scmp.lt.s32.totalorder %s200, 17
        %s204 = scalar_select %p203, %s200, 17
        %s205 = smul.addr %s204, 3
        %s206 = smul.addr %s202, 54
        %s207 = sadd.s32 %s205, %s206
        %s208 = smul.addr %s207, 4
        %s209 = scalar_lea.vmem %s0, %s208
        %s210 = sadd.s32 %s23, %s24
        %p212 = scmp.eq.s32.totalorder %s24, 0
        // Predicated region
        $region33: #{tpu_custom_call.1} parent=31 // pred_check
          %p213 = pneg %p212
        $region34: #{tpu_custom_call.1} parent=31 // pred_check_branch
          %215 = sbr.rel (%p213) target = $region36
        $region35: #{tpu_custom_call.1} parent=31 // pred_region
          %216 = vst [vmem:[#allocation2] sm:$0xff] 0.0
          %217 = vst [vmem:[#allocation2 + $0x8] sm:$0xff] 0.0
        $region36: #{tpu_custom_call.1} parent=31 // pred_fallthru
          _
        %s218 = smul.u32 %s24, 3
        %s219 = smul.addr %s218, 2
        %s220 = scalar_lea.vmem %s1, %s219
        %v221 = vld [vmem:[%s220] sm:$0x3]
        %v222 = vld [vmem:[%s220 + $0x2] sm:$0x3]
        %v223 = vld [vmem:[%s220 + $0x4] sm:$0x3]
        %v224 = vld [vmem:[#allocation2] sm:$0xff]
        %v225 = vld [vmem:[#allocation2 + $0x8] sm:$0xff]
        %v226 = vld [vmem:[%s209] sm:$0xf]
        %v227 = vld [vmem:[%s209 + $0x4] sm:$0xf]
        %v230 = vunpack.c.l.b16 %v226
        %v231 = vunpack.c.l.b16 %v227
        %v232 = vpack.c.b16 %v231, %v230
        %vm233 = vcmask 31744
        %v235 = vsel %vm233, %v232, 0
        %vm237 = vcmask 1041408
        %v239 = vsel %vm237, %v221, 0
        %241 = vmatprep.subr.bf16.mxu0 0
        %242 = vmatpush1.bf16.msra.mxu0 %v239
        %243 = vmatprep.subr.bf16.mxu0 0
        %244 = vmatpush1.bf16.msra.mxu0 0
        %245 = vmatprep.subr.bf16.mxu0 0
        %246 = vmatpush1.bf16.msra.mxu0 0
        %247 = vmatprep.subr.bf16.mxu0 0
        %248 = vmatpush1.bf16.msra.mxu0 0
        %249 = vmatprep.subr.bf16.mxu0 0
        %250 = vmatpush1.bf16.msra.mxu0 0
        %251 = vmatprep.subr.bf16.mxu0 0
        %252 = vmatpush1.bf16.msra.mxu0 0
        %253 = vmatprep.subr.bf16.mxu0 0
        %254 = vmatpush1.bf16.msra.mxu0 0
        %255 = vmatprep.subr.bf16.mxu0 0
        %256 = vmatpush1.bf16.msra.mxu0 0
        %257 = vmatprep.subr.bf16.mxu0 0
        %258 = vmatpush1.bf16.msra.mxu0 0
        %259 = vmatprep.subr.bf16.mxu0 0
        %260 = vmatpush1.bf16.msra.mxu0 0
        %261 = vmatprep.subr.bf16.mxu0 0
        %262 = vmatpush1.bf16.msra.mxu0 0
        %263 = vmatprep.subr.bf16.mxu0 0
        %264 = vmatpush1.bf16.msra.mxu0 0
        %265 = vmatprep.subr.bf16.mxu0 0
        %266 = vmatpush1.bf16.msra.mxu0 0
        %267 = vmatprep.subr.bf16.mxu0 0
        %268 = vmatpush1.bf16.msra.mxu0 0
        %269 = vmatprep.subr.bf16.mxu0 0
        %270 = vmatpush1.bf16.msra.mxu0 0
        %271 = vmatprep.subr.bf16.mxu0 0
        %272 = vmatpush1.bf16.msra.mxu0 0
        %273 = vmatprep.mubr.bf16.mxu0 0
        %274 = vmatmul.mubr.bf16.gmra.mrb[0].mxu0 %v235
        %v275 = vpop.f32.mrb[0].mxu0
        %v276 = vadd.f32 0.0, %v275
        %v277 = vpop.f32.mrb[0].mxu0
        %v278 = vpop.f32.mrb[0].mxu0
        %v279 = vadd.f32 0.0, %v278
        %v280 = vpop.f32.mrb[0].mxu0
        %281 = vdwg.mxu0
        %v282 = vadd.f32 %v224, %v276
        %v283 = vadd.f32 %v225, %v279
        %v284 = vld [vmem:[%s209] sm:$0xf]
        %v285 = vld [vmem:[%s209 + $0x4] sm:$0xf]
        %v286 = vld [vmem:[%s209 + $0x8] sm:$0x1]
        %v290 = vunpack.c.l.b16 %v284
        %v291 = vunpack.c.l.b16 %v285
        %v292 = vunpack.c.l.b16 %v286
        %v293 = vpack.c.b16 %v291, %v290
        %v294 = vpack.c.b16 %v292, %v292
        %vm295 = vsmask.f32 7424
        %v297 = vshrl.u32 %v293, 16
        %v299 = vshll.u32 %v293, 16
        %v301 = vrot.slane %v299, 1
        %v302 = vor.u32 %v297, %v301
        %v304 = vshll.u32 %v294, 16
        %v306 = vrot.slane %v304, 1
        %v307 = vsel %vm295, %v302, %v306
        %v309 = vsel %vm233, %v307, 0
        %v312 = vsel %vm237, %v222, 0
        %314 = vmatprep.subr.bf16.mxu0 0
        %315 = vmatpush1.bf16.msra.mxu0 %v312
        %316 = vmatprep.subr.bf16.mxu0 0
        %317 = vmatpush1.bf16.msra.mxu0 0
        %318 = vmatprep.subr.bf16.mxu0 0
        %319 = vmatpush1.bf16.msra.mxu0 0
        %320 = vmatprep.subr.bf16.mxu0 0
        %321 = vmatpush1.bf16.msra.mxu0 0
        %322 = vmatprep.subr.bf16.mxu0 0
        %323 = vmatpush1.bf16.msra.mxu0 0
        %324 = vmatprep.subr.bf16.mxu0 0
        %325 = vmatpush1.bf16.msra.mxu0 0
        %326 = vmatprep.subr.bf16.mxu0 0
        %327 = vmatpush1.bf16.msra.mxu0 0
        %328 = vmatprep.subr.bf16.mxu0 0
        %329 = vmatpush1.bf16.msra.mxu0 0
        %330 = vmatprep.subr.bf16.mxu0 0
        %331 = vmatpush1.bf16.msra.mxu0 0
        %332 = vmatprep.subr.bf16.mxu0 0
        %333 = vmatpush1.bf16.msra.mxu0 0
        %334 = vmatprep.subr.bf16.mxu0 0
        %335 = vmatpush1.bf16.msra.mxu0 0
        %336 = vmatprep.subr.bf16.mxu0 0
        %337 = vmatpush1.bf16.msra.mxu0 0
        %338 = vmatprep.subr.bf16.mxu0 0
        %339 = vmatpush1.bf16.msra.mxu0 0
        %340 = vmatprep.subr.bf16.mxu0 0
        %341 = vmatpush1.bf16.msra.mxu0 0
        %342 = vmatprep.subr.bf16.mxu0 0
        %343 = vmatpush1.bf16.msra.mxu0 0
        %344 = vmatprep.subr.bf16.mxu0 0
        %345 = vmatpush1.bf16.msra.mxu0 0
        %346 = vmatprep.mubr.bf16.mxu0 0
        %347 = vmatmul.mubr.bf16.gmra.mrb[0].mxu0 %v309
        %v348 = vpop.f32.mrb[0].mxu0
        %v349 = vadd.f32 0.0, %v348
        %v350 = vpop.f32.mrb[0].mxu0
        %v351 = vpop.f32.mrb[0].mxu0
        %v352 = vadd.f32 0.0, %v351
        %v353 = vpop.f32.mrb[0].mxu0
        %354 = vdwg.mxu0
        %v355 = vadd.f32 %v282, %v349
        %v356 = vadd.f32 %v283, %v352
        %v357 = vld [vmem:[%s209] sm:$0xe]
        %v359 = vunpack.c.l.b16 %v357
        %v360 = vpack.c.b16 %v291, %v359
        %vm361 = vcmask 1046528
        %v362 = vrot.slane %v360, 1
        %v363 = vrot.slane %v294, 1
        %v364 = vsel %vm361, %v362, %v363
        %v366 = vsel %vm233, %v364, 0
        %v369 = vsel %vm237, %v223, 0
        %371 = vmatprep.subr.bf16.mxu0 0
        %372 = vmatpush1.bf16.msra.mxu0 %v369
        %373 = vmatprep.subr.bf16.mxu0 0
        %374 = vmatpush1.bf16.msra.mxu0 0
        %375 = vmatprep.subr.bf16.mxu0 0
        %376 = vmatpush1.bf16.msra.mxu0 0
        %377 = vmatprep.subr.bf16.mxu0 0
        %378 = vmatpush1.bf16.msra.mxu0 0
        %379 = vmatprep.subr.bf16.mxu0 0
        %380 = vmatpush1.bf16.msra.mxu0 0
        %381 = vmatprep.subr.bf16.mxu0 0
        %382 = vmatpush1.bf16.msra.mxu0 0
        %383 = vmatprep.subr.bf16.mxu0 0
        %384 = vmatpush1.bf16.msra.mxu0 0
        %385 = vmatprep.subr.bf16.mxu0 0
        %386 = vmatpush1.bf16.msra.mxu0 0
        %387 = vmatprep.subr.bf16.mxu0 0
        %388 = vmatpush1.bf16.msra.mxu0 0
        %389 = vmatprep.subr.bf16.mxu0 0
        %390 = vmatpush1.bf16.msra.mxu0 0
        %391 = vmatprep.subr.bf16.mxu0 0
        %392 = vmatpush1.bf16.msra.mxu0 0
        %393 = vmatprep.subr.bf16.mxu0 0
        %394 = vmatpush1.bf16.msra.mxu0 0
        %395 = vmatprep.subr.bf16.mxu0 0
        %396 = vmatpush1.bf16.msra.mxu0 0
        %397 = vmatprep.subr.bf16.mxu0 0
        %398 = vmatpush1.bf16.msra.mxu0 0
        %399 = vmatprep.subr.bf16.mxu0 0
        %400 = vmatpush1.bf16.msra.mxu0 0
        %401 = vmatprep.subr.bf16.mxu0 0
        %402 = vmatpush1.bf16.msra.mxu0 0
        %403 = vmatprep.mubr.bf16.mxu0 0
        %404 = vmatmul.mubr.bf16.gmra.mrb[0].mxu0 %v366
        %v405 = vpop.f32.mrb[0].mxu0
        %v406 = vadd.f32 0.0, %v405
        %v407 = vpop.f32.mrb[0].mxu0
        %v408 = vpop.f32.mrb[0].mxu0
        %v409 = vadd.f32 0.0, %v408
        %v410 = vpop.f32.mrb[0].mxu0
        %411 = vdwg.mxu0
        %v412 = vadd.f32 %v355, %v406
        %v413 = vadd.f32 %v356, %v409
        %414 = vst [vmem:[#allocation2] sm:$0xff] %v412
        %415 = vst [vmem:[#allocation2 + $0x8] sm:$0xff] %v413
        %p416 = scmp.eq.s32.totalorder %s24, 2
        // Predicated region
        $region37: #{tpu_custom_call.1} parent=31 // pred_check
          %p417 = pneg %p416
        $region38: #{tpu_custom_call.1} parent=31 // pred_check_branch
          %419 = sbr.rel (%p417) target = $region40
        $region39: #{tpu_custom_call.1} parent=31 // pred_region
          %v420 = vld [vmem:[#allocation2] sm:$0xff]
          %v421 = vld [vmem:[#allocation2 + $0x8] sm:$0xff]
          %v422 = vld [vmem:[%s2] sm:$0x1]
          %v424 = vlaneseq
          %v425 = vshrl.u32 %v424, 7
          %v426 = vsub.s32 0, %v425
          %v427 = vrot.slane %v422, %v426
          %v429 = vadd.f32 %v420, %v427
          %v430 = vadd.f32 %v421, %v427
          %v431 = vxor.u32 %v429, 2147483648
          %v432 = vxor.u32 %v430, 2147483648
          %v433 = vmul.f32 %v431, 1.442695
          %v434 = vpow.pop %v433
          %v435 = vmul.f32 %v432, 1.442695
          %v436 = vpow.pop %v435
          %v437 = vadd.f32 %v434, 1.0
          %v438 = vadd.f32 %v436, 1.0
          %v439 = vrcp.pop %v437
          %v440 = vmul.f32 1.0, %v439
          %v441 = vrcp.pop %v438
          %v442 = vmul.f32 1.0, %v441
          %v443 = vmul.f32 %v429, %v440
          %v444 = vmul.f32 %v430, %v442
          %445 = vst [vmem:[%s199] sm:$0xff] %v443
          %446 = vst [vmem:[%s199 + $0x8] sm:$0xff] %v444
        $region40: #{tpu_custom_call.1} parent=31 // pred_fallthru
          _
        %s447 = sand.u32 %s118, 1
        %s448 = scalar_lea.sflag [#allocation4], %s447
        %s449 = sand.u32 %s118, 1
        %s450 = smul.addr %s449, 16
        %s451 = scalar_lea.vmem [#allocation3], %s450
        // Predicated region
        $region41: #{tpu_custom_call.1} parent=31 // pred_check
          %p452 = pneg %p128
        $region42: #{tpu_custom_call.1} parent=31 // pred_check_branch
          %454 = sbr.rel (%p452) target = $region44
        $region43: #{tpu_custom_call.1} parent=31 // pred_region
          %s456 = ssub.s32 256, 256
          %457 = vsyncadd %s448, %s456
          %s458 = smul.addr %s23, 2
          %s459 = smul.addr %s22, 32
          %s460 = sadd.s32 %s458, %s459
          %s461 = smul.addr %s460, 128
          %s462 = scalar_lea.hbm %s3, %s461
          %s463 = sshll.u32 %s451, 4
          %s464 = int_to_ptr.vmem [resolvable:$true] %s463
          %469 = dma.vmem_to_hbm [thread:$0]  %s464, 256, %s462, %s448, 128, 128, 8
        $region44: #{tpu_custom_call.1} parent=31 // pred_fallthru
          _
      $region32: #{tpu_custom_call.1} parent=5 // pred_fallthru
        _
      %p470 = scmp.le.s32.totalorder 2, %s12
      // Predicated region
      $region45: #{tpu_custom_call.1} parent=5 // pred_check
        %p471 = pneg %p470
      $region46: #{tpu_custom_call.1} parent=5 // pred_check_branch
        %473 = sbr.rel (%p471) target = $region48
      $region47: #{tpu_custom_call.1} parent=5 // pred_region
        %s474 = ssub.s32 %s12, 2
        // Predicated region
        $region49: #{tpu_custom_call.1} parent=47 // pred_check
          %p475 = pneg %p134
        $region50: #{tpu_custom_call.1} parent=47 // pred_check_branch
          %477 = sbr.rel (%p475) target = $region52
        $region51: #{tpu_custom_call.1} parent=47 // pred_region
          %s478 = sand.u32 %s119, 1
          %s479 = scalar_lea.sflag [#allocation4], %s478
          %s480 = sand.u32 %s119, 1
          %s481 = smul.addr %s480, 16
          %s482 = scalar_lea.vmem [#allocation3], %s481
          %483 = dma.done %s479, 256
        $region52: #{tpu_custom_call.1} parent=47 // pred_fallthru
          _
      $region48: #{tpu_custom_call.1} parent=5 // pred_fallthru
        _
    $region6: #{tpu_custom_call.1} parent=1 // loop_footer
      %s16 = sadd.s32 1, %s12
    $region7: #{tpu_custom_call.1} parent=1 // loop_footer_branch
      %11 = sbr.rel target = $region3
    $region8: #{tpu_custom_call.1} parent=1 // loop_exit
      _
    %484 = vsyncpa [#allocation4], 1
    %s485 = scalar_lea.sflag [#allocation4], 1
    %486 = vsyncpa %s485, 1

</llo_original>
